<compile_context>
chip_gen: v7x
topology: tpu7x:2x2x1
jax: 0.10.0
libtpu: 0.0.40
codegen_flags: <defaults>
</compile_context>

<pallas_src>
import jax
import jax.numpy as jnp
from jax.experimental import pallas as pl
from jax.experimental.pallas import tpu as pltpu

D_MODEL = 32
D_FF = 64


def feed_forward_kernel(x_ref, w1_ref, b1_ref, w2_ref, b2_ref, o_ref):
    """One row tile: out = relu(x @ W1 + b1) @ W2 + b2 (dropout = identity)."""
    x = x_ref[...]                                           # (tm, P) bf16
    h = jnp.dot(x, w1_ref[...], preferred_element_type=jnp.float32)
    h = jnp.maximum(h + b1_ref[...], 0.0)                    # bias+ReLU on f32 accumulator
    # nn.Dropout(0.1) is identity in eval mode.
    h = h.astype(w2_ref.dtype)                               # native bf16 MXU path, pass 2
    out = jnp.dot(h, w2_ref[...], preferred_element_type=jnp.float32) + b2_ref[...]
    o_ref[...] = out.astype(o_ref.dtype)


def _default_block_rows():
    """Packed-row tile default, tuned per TPU generation (HBM BW vs. VMEM)."""
    try:
        kind = jax.devices()[0].device_kind.lower()
    except Exception:
        kind = ""
    if "v5 lite" in kind or "v5e" in kind or "v5litepod" in kind:
        return 4096        # ~820 GB/s HBM; modest tile amortizes step overhead
    if "v7" in kind:
        return 8192        # ~3.2 TB/s HBM per TC, but only 64 MiB physical VMEM
    return 8192            # v6e / default


def _pack_params(w1, b1, w2, b2, pack, compute_dtype):
    """Block-diagonal replication so `pack` tokens share one lane-dense row."""
    eye = jnp.eye(pack, dtype=w1.dtype)
    w1p = jnp.kron(eye, w1).astype(compute_dtype)            # (pack*d_model, pack*d_ff)
    w2p = jnp.kron(eye, w2).astype(compute_dtype)            # (pack*d_ff, pack*d_model)
    b1p = jnp.tile(b1.reshape(1, -1), (1, pack)).astype(jnp.float32)
    b2p = jnp.tile(b2.reshape(1, -1), (1, pack)).astype(jnp.float32)
    return w1p, b1p, w2p, b2p


def feed_forward(x, w1, b1, w2, b2, *, block_rows=None, compute_dtype=jnp.bfloat16):
    """x: (..., d_model) -> (..., d_model) in compute_dtype (default bf16 I/O)."""
    orig_shape = x.shape
    d_model = orig_shape[-1]
    d_ff = w1.shape[-1]

    x2d = x.reshape(-1, d_model)
    n = x2d.shape[0]

    # --- Lane-dense packing: fold `pack` tokens into one 128-lane row --------
    pack = max(1, 128 // d_model) if d_model < 128 else 1
    while pack > 1 and n % pack:
        pack //= 2
    # TODO(synk): if n is not divisible by the target pack, a tiny tail call
    # would keep full lane density; we fall back to a smaller pack instead.
    p_in = pack * d_model
    p_ff = pack * d_ff
    x_p = x2d.reshape(n // pack, p_in).astype(compute_dtype)  # pure reshape + one cast
    w1p, b1p, w2p, b2p = _pack_params(w1, b1, w2, b2, pack, compute_dtype)
    n_p = x_p.shape[0]

    # --- Row tiling -----------------------------------------------------------
    sub = 16 if jnp.dtype(compute_dtype).itemsize == 2 else 8  # sublane tile
    if block_rows is None:
        block_rows = _default_block_rows()
    if n_p <= sub:
        tm = n_p                                              # single full-array block
    else:
        # Cap so the grid has >=2 steps (feeds both v7x TensorCores); round to
        # the dtype's sublane tile.  Partial last block is handled by Pallas.
        half = pl.cdiv(pl.cdiv(n_p, 2), sub) * sub
        tm = min(max(sub, (block_rows // sub) * sub), half)
    grid = (pl.cdiv(n_p, tm),)

    itemsize = jnp.dtype(compute_dtype).itemsize
    cost = pl.CostEstimate(
        flops=4 * n * d_model * d_ff,
        transcendentals=0,
        bytes_accessed=(2 * n * d_model * itemsize            # x + out
                        + (w1p.size + w2p.size) * itemsize
                        + (b1p.size + b2p.size) * 4),
    )

    out_p = pl.pallas_call(
        feed_forward_kernel,
        out_shape=jax.ShapeDtypeStruct((n_p, p_in), compute_dtype),
        grid=grid,
        in_specs=[
            pl.BlockSpec((tm, p_in), lambda i: (i, 0)),       # x row tile
            pl.BlockSpec((p_in, p_ff), lambda i: (0, 0)),     # W1' (resident)
            pl.BlockSpec((1, p_ff), lambda i: (0, 0)),        # b1'
            pl.BlockSpec((p_ff, p_in), lambda i: (0, 0)),     # W2'
            pl.BlockSpec((1, p_in), lambda i: (0, 0)),        # b2'
        ],
        out_specs=pl.BlockSpec((tm, p_in), lambda i: (i, 0)),
        compiler_params=pltpu.CompilerParams(
            dimension_semantics=("parallel",),
            vmem_limit_bytes=48 * 1024 * 1024,
        ),
        cost_estimate=cost,
    )(x_p, w1p, b1p, w2p, b2p)

    return out_p.reshape(orig_shape)


def init_params(key):
    """Deterministic init; Linear weights stored pre-transposed to (in, out)."""
    k1, k2, k3, k4 = jax.random.split(key, 4)
    scale = 0.02
    w1 = jax.random.normal(k1, (D_MODEL, D_FF), jnp.float32) * scale
    b1 = jax.random.normal(k2, (1, D_FF), jnp.float32) * scale
    w2 = jax.random.normal(k3, (D_FF, D_MODEL), jnp.float32) * scale
    b2 = jax.random.normal(k4, (1, D_MODEL), jnp.float32) * scale
    return w1, b1, w2, b2


def feed_forward_ref(x, w1, b1, w2, b2):
    h = jnp.maximum(x @ w1 + b1, 0.0)     # dropout = identity (eval)
    return h @ w2 + b2


if __name__ == "__main__":
    key = jax.random.PRNGKey(0)
    k_x, k_p = jax.random.split(key)

    B, S = 2, 8
    x = jax.random.normal(k_x, (B, S, D_MODEL), jnp.float32)
    w1, b1, w2, b2 = init_params(k_p)

    out = feed_forward(x, w1, b1, w2, b2)
    jax.block_until_ready(out)

    assert out.shape == (B, S, D_MODEL)
    ref = feed_forward_ref(x, w1, b1, w2, b2)
    err = float(jnp.max(jnp.abs(out.astype(jnp.float32) - ref)))
    assert err < 1e-2, f"mismatch vs pure-JAX reference (max abs err {err})"

    print("KERNEL_OK")
</pallas_src>

<mosaic_0001>
module attributes {stable_mosaic.version = 11 : i64} {
  func.func @feed_forward_kernel(%arg0: i32, %arg1: memref<4x128xbf16, #tpu.memory_space<vmem>>, %arg2: memref<128x256xbf16, #tpu.memory_space<vmem>>, %arg3: memref<1x256xf32, #tpu.memory_space<vmem>>, %arg4: memref<256x128xbf16, #tpu.memory_space<vmem>>, %arg5: memref<1x128xf32, #tpu.memory_space<vmem>>, %arg6: memref<4x128xbf16, #tpu.memory_space<vmem>>) attributes {dimension_semantics = [#tpu.dimension_semantics<parallel>], iteration_bounds = array<i64: 1>, scalar_prefetch = 0 : i64, scratch_operands = 0 : i64, tpu.core_type = #tpu.core_type<tc>, window_params = [{transform_indices = @transform_0, window_bounds = array<i64: 4, 128>}, {pipeline_mode = #tpu.pipeline_mode<synchronous>, transform_indices = @transform_1, window_bounds = array<i64: 128, 256>}, {pipeline_mode = #tpu.pipeline_mode<synchronous>, transform_indices = @transform_2, window_bounds = array<i64: 1, 256>}, {pipeline_mode = #tpu.pipeline_mode<synchronous>, transform_indices = @transform_3, window_bounds = array<i64: 256, 128>}, {pipeline_mode = #tpu.pipeline_mode<synchronous>, transform_indices = @transform_4, window_bounds = array<i64: 1, 128>}, {transform_indices = @transform_5, window_bounds = array<i64: 4, 128>}]} {
    %c0 = arith.constant 0 : index
    %c0_0 = arith.constant 0 : index
    %0 = vector.load %arg1[%c0, %c0_0] : memref<4x128xbf16, #tpu.memory_space<vmem>>, vector<4x128xbf16>
    %c0_1 = arith.constant 0 : index
    %c0_2 = arith.constant 0 : index
    %1 = vector.load %arg2[%c0_1, %c0_2] : memref<128x256xbf16, #tpu.memory_space<vmem>>, vector<128x256xbf16>
    %cst = arith.constant dense<0.000000e+00> : vector<4x256xf32>
    %2 = tpu.matmul %0, %1, %cst {dimension_numbers = #tpu.dot_dimension_numbers<[1], [0], [0], [1], [0, 0, 1, 1], [], []>} : vector<4x128xbf16>, vector<128x256xbf16>, vector<4x256xf32> -> vector<4x256xf32>
    %c0_3 = arith.constant 0 : index
    %c0_4 = arith.constant 0 : index
    %3 = vector.load %arg3[%c0_3, %c0_4] : memref<1x256xf32, #tpu.memory_space<vmem>>, vector<1x256xf32>
    %4 = vector.broadcast %3 : vector<1x256xf32> to vector<4x256xf32>
    %5 = arith.addf %2, %4 : vector<4x256xf32>
    %cst_5 = arith.constant 0.000000e+00 : f32
    %6 = vector.broadcast %cst_5 : f32 to vector<4x256xf32>
    %7 = arith.maximumf %5, %6 : vector<4x256xf32>
    %8 = arith.truncf %7 : vector<4x256xf32> to vector<4x256xbf16>
    %c0_6 = arith.constant 0 : index
    %c0_7 = arith.constant 0 : index
    %9 = vector.load %arg4[%c0_6, %c0_7] : memref<256x128xbf16, #tpu.memory_space<vmem>>, vector<256x128xbf16>
    %cst_8 = arith.constant dense<0.000000e+00> : vector<4x128xf32>
    %10 = tpu.matmul %8, %9, %cst_8 {dimension_numbers = #tpu.dot_dimension_numbers<[1], [0], [0], [1], [0, 0, 1, 1], [], []>} : vector<4x256xbf16>, vector<256x128xbf16>, vector<4x128xf32> -> vector<4x128xf32>
    %c0_9 = arith.constant 0 : index
    %c0_10 = arith.constant 0 : index
    %11 = vector.load %arg5[%c0_9, %c0_10] : memref<1x128xf32, #tpu.memory_space<vmem>>, vector<1x128xf32>
    %12 = vector.broadcast %11 : vector<1x128xf32> to vector<4x128xf32>
    %13 = arith.addf %10, %12 : vector<4x128xf32>
    %14 = arith.truncf %13 : vector<4x128xf32> to vector<4x128xbf16>
    %c0_11 = arith.constant 0 : index
    %c0_12 = arith.constant 0 : index
    %15 = vector.load %arg6[%c0_11, %c0_12] : memref<4x128xbf16, #tpu.memory_space<vmem>>, vector<4x128xbf16>
    tpu.vector_store %arg6[%c0_11, %c0_12], %14 {strides = array<i32>} : memref<4x128xbf16, #tpu.memory_space<vmem>>, vector<4x128xbf16>,
    return
  }
  func.func @transform_0(%arg0: i32) -> (i32, i32) {
    %c0_i32 = arith.constant 0 : i32
    %c0_i32_0 = arith.constant 0 : i32
    return %arg0, %c0_i32 : i32, i32
  }
  func.func @transform_1(%arg0: i32) -> (i32, i32) {
    %c0_i32 = arith.constant 0 : i32
    %c0_i32_0 = arith.constant 0 : i32
    %c0_i32_1 = arith.constant 0 : i32
    return %c0_i32, %c0_i32_0 : i32, i32
  }
  func.func @transform_2(%arg0: i32) -> (i32, i32) {
    %c0_i32 = arith.constant 0 : i32
    %c0_i32_0 = arith.constant 0 : i32
    %c0_i32_1 = arith.constant 0 : i32
    return %c0_i32, %c0_i32_0 : i32, i32
  }
  func.func @transform_3(%arg0: i32) -> (i32, i32) {
    %c0_i32 = arith.constant 0 : i32
    %c0_i32_0 = arith.constant 0 : i32
    %c0_i32_1 = arith.constant 0 : i32
    return %c0_i32, %c0_i32_0 : i32, i32
  }
  func.func @transform_4(%arg0: i32) -> (i32, i32) {
    %c0_i32 = arith.constant 0 : i32
    %c0_i32_0 = arith.constant 0 : i32
    %c0_i32_1 = arith.constant 0 : i32
    return %c0_i32, %c0_i32_0 : i32, i32
  }
  func.func @transform_5(%arg0: i32) -> (i32, i32) {
    %c0_i32 = arith.constant 0 : i32
    %c0_i32_0 = arith.constant 0 : i32
    return %arg0, %c0_i32 : i32, i32
  }
}

</mosaic_0001>

<llo_original>
// kernel: tpu_custom_call.1
$region0: #{tpu_custom_call.1}
  #allocation0 [shape = 'u32[]', space=smem, size = 0x4, offset = 0x4, fixed_abs, tag = 'smem constant byte address 0x4 - core index']
  #allocation1 [shape = 'u32[144,128]{1,0:T(1,128)}', space=vmem, size = 0x12000, scoped, tag = 'internal scratch']
  %s0 = inlined_call_operand.hbm [shape: bf16[4,128], index: 0, kind: input, shape index: {}]
  %s1 = inlined_call_operand.hbm [shape: bf16[128,256], index: 1, kind: input, shape index: {}]
  %s2 = inlined_call_operand.vmem [shape: f32[1,256], index: 2, kind: input, shape index: {}]
  %s3 = inlined_call_operand.hbm [shape: bf16[256,128], index: 3, kind: input, shape index: {}]
  %s4 = inlined_call_operand.vmem [shape: f32[1,128], index: 4, kind: input, shape index: {}]
  %s5 = inlined_call_operand.hbm [shape: bf16[4,128], index: 5, kind: output, shape index: {}]
  %s6 = sld [smem:[#allocation0]]
  $region42: #{tpu_custom_call.1} parent=0
    _
  %s8 = ssub.s32 1, %s6
  %s9 = scalar_select 0, %s8, %s6
  $region1: #{tpu_custom_call.1} parent=0
    #allocation2 [shape = 'u8[1024]{0}', space=vmem, size = 0x400, scoped, tag = 'input window, operand 0, single buffered']
    #allocation3 [shape = 's32[1]{0}', space=sflag, size = 0x4, scoped, tag = 'scoped memory for tpu_custom_call.1']
    #allocation4 [shape = 's32[1]{0}', space=sflag, size = 0x4, scoped, tag = 'scoped memory for tpu_custom_call.1']
    #allocation5 [shape = 'u8[65536]{0}', space=vmem, size = 0x10000, scoped, tag = 'input window, operand 1, single buffered']
    #allocation6 [shape = 's32[1]{0}', space=sflag, size = 0x4, scoped, tag = 'scoped memory for tpu_custom_call.1']
    #allocation7 [shape = 'u8[65536]{0}', space=vmem, size = 0x10000, scoped, tag = 'input window, operand 3, single buffered']
    #allocation8 [shape = 'u8[1024]{0}', space=vmem, size = 0x400, scoped, tag = 'output window, operand 0, single buffered']
    %10 = vsyncpa [#allocation3], 0
    %11 = vsyncpa [#allocation6], 0
    %12 = vsyncpa [#allocation4], 0
    // Predicated region
    $region2: #{tpu_custom_call.1} parent=1 // pred_check
      _
    $region3: #{tpu_custom_call.1} parent=1 // pred_check_branch
      %14 = sbr.rel (0) target = $region5
    $region4: #{tpu_custom_call.1} parent=1 // pred_region
      %s16 = ssub.s32 32, 32
      %17 = vsyncadd [#allocation3], %s16
      %s19 = sshll.u32 [#allocation2], 4
      %s20 = int_to_ptr.vmem [resolvable:$true] %s19
      %22 = dma.hbm_to_vmem [thread:$0]  %s0, 32, %s20, [#allocation3]
    $region5: #{tpu_custom_call.1} parent=1 // pred_fallthru
      _
    // Predicated region
    $region6: #{tpu_custom_call.1} parent=1 // pred_check
      _
    $region7: #{tpu_custom_call.1} parent=1 // pred_check_branch
      %24 = sbr.rel (0) target = $region9
    $region8: #{tpu_custom_call.1} parent=1 // pred_region
      %s26 = ssub.s32 2048, 2048
      %27 = vsyncadd [#allocation6], %s26
      %s28 = sshll.u32 [#allocation5], 4
      %s29 = int_to_ptr.vmem [resolvable:$true] %s28
      %34 = dma.hbm_to_vmem [thread:$0]  %s1, 2048, %s29, [#allocation6], 128, 128, 8
    $region9: #{tpu_custom_call.1} parent=1 // pred_fallthru
      _
    // Predicated region
    $region10: #{tpu_custom_call.1} parent=1 // pred_check
      _
    $region11: #{tpu_custom_call.1} parent=1 // pred_check_branch
      %36 = sbr.rel (0) target = $region13
    $region12: #{tpu_custom_call.1} parent=1 // pred_region
      _
    $region13: #{tpu_custom_call.1} parent=1 // pred_fallthru
      _
    // Predicated region
    $region14: #{tpu_custom_call.1} parent=1 // pred_check
      _
    $region15: #{tpu_custom_call.1} parent=1 // pred_check_branch
      %38 = sbr.rel (0) target = $region17
    $region16: #{tpu_custom_call.1} parent=1 // pred_region
      %s40 = ssub.s32 2048, 2048
      %41 = vsyncadd [#allocation6], %s40
      %s42 = sshll.u32 [#allocation7], 4
      %s43 = int_to_ptr.vmem [resolvable:$true] %s42
      %48 = dma.hbm_to_vmem [thread:$0]  %s3, 2048, %s43, [#allocation6], 64, 64, 4
    $region17: #{tpu_custom_call.1} parent=1 // pred_fallthru
      _
    // Predicated region
    $region18: #{tpu_custom_call.1} parent=1 // pred_check
      _
    $region19: #{tpu_custom_call.1} parent=1 // pred_check_branch
      %50 = sbr.rel (0) target = $region21
    $region20: #{tpu_custom_call.1} parent=1 // pred_region
      _
    $region21: #{tpu_custom_call.1} parent=1 // pred_fallthru
      _
    // Predicated region
    $region22: #{tpu_custom_call.1} parent=1 // pred_check
      _
    $region23: #{tpu_custom_call.1} parent=1 // pred_check_branch
      %52 = sbr.rel (0) target = $region25
    $region24: #{tpu_custom_call.1} parent=1 // pred_region
      %53 = dma.done [#allocation3], 32
    $region25: #{tpu_custom_call.1} parent=1 // pred_fallthru
      _
    // Predicated region
    $region26: #{tpu_custom_call.1} parent=1 // pred_check
      _
    $region27: #{tpu_custom_call.1} parent=1 // pred_check_branch
      %55 = sbr.rel (0) target = $region29
    $region28: #{tpu_custom_call.1} parent=1 // pred_region
      %56 = dma.done [#allocation6], 2048
    $region29: #{tpu_custom_call.1} parent=1 // pred_fallthru
      _
    // Predicated region
    $region30: #{tpu_custom_call.1} parent=1 // pred_check
      _
    $region31: #{tpu_custom_call.1} parent=1 // pred_check_branch
      %58 = sbr.rel (0) target = $region33
    $region32: #{tpu_custom_call.1} parent=1 // pred_region
      %59 = dma.done [#allocation6], 2048
    $region33: #{tpu_custom_call.1} parent=1 // pred_fallthru
      _
    %v61 = vld [vmem:[#allocation2] sm:$0x3]
    %v62 = vld [vmem:[#allocation5] sm:$0xff]
    %v63 = vld [vmem:[#allocation5 + $0x8] sm:$0xff]
    %v64 = vld [vmem:[#allocation5 + $0x10] sm:$0xff]
    %v65 = vld [vmem:[#allocation5 + $0x18] sm:$0xff]
    %v66 = vld [vmem:[#allocation5 + $0x20] sm:$0xff]
    %v67 = vld [vmem:[#allocation5 + $0x28] sm:$0xff]
    %v68 = vld [vmem:[#allocation5 + $0x30] sm:$0xff]
    %v69 = vld [vmem:[#allocation5 + $0x38] sm:$0xff]
    %v70 = vld [vmem:[#allocation5 + $0x40] sm:$0xff]
    %v71 = vld [vmem:[#allocation5 + $0x48] sm:$0xff]
    %v72 = vld [vmem:[#allocation5 + $0x50] sm:$0xff]
    %v73 = vld [vmem:[#allocation5 + $0x58] sm:$0xff]
    %v74 = vld [vmem:[#allocation5 + $0x60] sm:$0xff]
    %v75 = vld [vmem:[#allocation5 + $0x68] sm:$0xff]
    %v76 = vld [vmem:[#allocation5 + $0x70] sm:$0xff]
    %v77 = vld [vmem:[#allocation5 + $0x78] sm:$0xff]
    %v78 = vld [vmem:[%s2] sm:$0x3]
    %v80 = vlaneseq
    %v81 = vshrl.u32 %v80, 7
    %v82 = vsub.s32 0, %v81
    %v83 = vrot.slane %v78, %v82
    %v84 = vlaneseq
    %v85 = vshrl.u32 %v84, 7
    %v86 = vsub.s32 1, %v85
    %v87 = vrot.slane %v78, %v86
    %v106 = vunpack.c.l.b16 %v62
    %v107 = vunpack.c.h.b16 %v62
    %v108 = vunpack.c.l.b16 %v63
    %v109 = vunpack.c.h.b16 %v63
    %v110 = vunpack.c.l.b16 %v64
    %v111 = vunpack.c.h.b16 %v64
    %v112 = vunpack.c.l.b16 %v65
    %v113 = vunpack.c.h.b16 %v65
    %v114 = vunpack.c.l.b16 %v66
    %v115 = vunpack.c.h.b16 %v66
    %v116 = vunpack.c.l.b16 %v67
    %v117 = vunpack.c.h.b16 %v67
    %v118 = vunpack.c.l.b16 %v68
    %v119 = vunpack.c.h.b16 %v68
    %v120 = vunpack.c.l.b16 %v69
    %v121 = vunpack.c.h.b16 %v69
    %v122 = vunpack.c.l.b16 %v70
    %v123 = vunpack.c.h.b16 %v70
    %v124 = vunpack.c.l.b16 %v71
    %v125 = vunpack.c.h.b16 %v71
    %v126 = vunpack.c.l.b16 %v72
    %v127 = vunpack.c.h.b16 %v72
    %v128 = vunpack.c.l.b16 %v73
    %v129 = vunpack.c.h.b16 %v73
    %v130 = vunpack.c.l.b16 %v74
    %v131 = vunpack.c.h.b16 %v74
    %v132 = vunpack.c.l.b16 %v75
    %v133 = vunpack.c.h.b16 %v75
    %v134 = vunpack.c.l.b16 %v76
    %v135 = vunpack.c.h.b16 %v76
    %v136 = vunpack.c.l.b16 %v77
    %v137 = vunpack.c.h.b16 %v77
    %v138 = vpack.c.b16 %v108, %v106
    %v139 = vpack.c.b16 %v109, %v107
    %v140 = vpack.c.b16 %v112, %v110
    %v141 = vpack.c.b16 %v113, %v111
    %v142 = vpack.c.b16 %v116, %v114
    %v143 = vpack.c.b16 %v117, %v115
    %v144 = vpack.c.b16 %v120, %v118
    %v145 = vpack.c.b16 %v121, %v119
    %v146 = vpack.c.b16 %v124, %v122
    %v147 = vpack.c.b16 %v125, %v123
    %v148 = vpack.c.b16 %v128, %v126
    %v149 = vpack.c.b16 %v129, %v127
    %v150 = vpack.c.b16 %v132, %v130
    %v151 = vpack.c.b16 %v133, %v131
    %v152 = vpack.c.b16 %v136, %v134
    %v153 = vpack.c.b16 %v137, %v135
    %170 = vmatprep.subr.bf16.mxu0 %v139
    %171 = vmatpush1.bf16.msra.mxu0 %v138
    %172 = vmatprep.subr.bf16.mxu0 %v141
    %173 = vmatpush1.bf16.msra.mxu0 %v140
    %174 = vmatprep.subr.bf16.mxu0 %v143
    %175 = vmatpush1.bf16.msra.mxu0 %v142
    %176 = vmatprep.subr.bf16.mxu0 %v145
    %177 = vmatpush1.bf16.msra.mxu0 %v144
    %178 = vmatprep.subr.bf16.mxu0 %v147
    %179 = vmatpush1.bf16.msra.mxu0 %v146
    %180 = vmatprep.subr.bf16.mxu0 %v149
    %181 = vmatpush1.bf16.msra.mxu0 %v148
    %182 = vmatprep.subr.bf16.mxu0 %v151
    %183 = vmatpush1.bf16.msra.mxu0 %v150
    %184 = vmatprep.subr.bf16.mxu0 %v153
    %185 = vmatpush1.bf16.msra.mxu0 %v152
    %186 = vmatprep.subr.bf16.mxu0 0
    %187 = vmatpush1.bf16.msra.mxu0 0
    %188 = vmatprep.subr.bf16.mxu0 0
    %189 = vmatpush1.bf16.msra.mxu0 0
    %190 = vmatprep.subr.bf16.mxu0 0
    %191 = vmatpush1.bf16.msra.mxu0 0
    %192 = vmatprep.subr.bf16.mxu0 0
    %193 = vmatpush1.bf16.msra.mxu0 0
    %194 = vmatprep.subr.bf16.mxu0 0
    %195 = vmatpush1.bf16.msra.mxu0 0
    %196 = vmatprep.subr.bf16.mxu0 0
    %197 = vmatpush1.bf16.msra.mxu0 0
    %198 = vmatprep.subr.bf16.mxu0 0
    %199 = vmatpush1.bf16.msra.mxu0 0
    %200 = vmatprep.subr.bf16.mxu0 0
    %201 = vmatpush1.bf16.msra.mxu0 0
    %202 = vmatprep.mubr.bf16.mxu0 0
    %203 = vmatmul.mubr.bf16.gmra.mrb[0].mxu0 %v61
    %v204 = vpop.f32.mrb[0].mxu0
    %v205 = vadd.f32 %v83, %v204
    %v206 = vpop.f32.mrb[0].mxu0
    %v207 = vadd.f32 %v87, %v206
    %v208 = vpop.f32.mrb[0].mxu0
    %v209 = vpop.f32.mrb[0].mxu0
    %210 = vdwg.mxu0
    %v211 = vmax.f32 %v205, 0.0
    %v212 = vmax.f32 %v207, 0.0
    %v213 = vpack.c.bf16 %v211, %v211
    %v214 = vpack.c.bf16 %v212, %v212
    %v215 = vld [vmem:[#allocation7] sm:$0xf]
    %v216 = vld [vmem:[#allocation7 + $0x4] sm:$0xf]
    %v217 = vld [vmem:[#allocation7 + $0x8] sm:$0xf]
    %v218 = vld [vmem:[#allocation7 + $0xc] sm:$0xf]
    %v219 = vld [vmem:[#allocation7 + $0x10] sm:$0xf]
    %v220 = vld [vmem:[#allocation7 + $0x14] sm:$0xf]
    %v221 = vld [vmem:[#allocation7 + $0x18] sm:$0xf]
    %v222 = vld [vmem:[#allocation7 + $0x1c] sm:$0xf]
    %v223 = vld [vmem:[#allocation7 + $0x20] sm:$0xf]
    %v224 = vld [vmem:[#allocation7 + $0x24] sm:$0xf]
    %v225 = vld [vmem:[#allocation7 + $0x28] sm:$0xf]
    %v226 = vld [vmem:[#allocation7 + $0x2c] sm:$0xf]
    %v227 = vld [vmem:[#allocation7 + $0x30] sm:$0xf]
    %v228 = vld [vmem:[#allocation7 + $0x34] sm:$0xf]
    %v229 = vld [vmem:[#allocation7 + $0x38] sm:$0xf]
    %v230 = vld [vmem:[#allocation7 + $0x3c] sm:$0xf]
    %v231 = vld [vmem:[#allocation7 + $0x40] sm:$0xf]
    %v232 = vld [vmem:[#allocation7 + $0x44] sm:$0xf]
    %v233 = vld [vmem:[#allocation7 + $0x48] sm:$0xf]
    %v234 = vld [vmem:[#allocation7 + $0x4c] sm:$0xf]
    %v235 = vld [vmem:[#allocation7 + $0x50] sm:$0xf]
    %v236 = vld [vmem:[#allocation7 + $0x54] sm:$0xf]
    %v237 = vld [vmem:[#allocation7 + $0x58] sm:$0xf]
    %v238 = vld [vmem:[#allocation7 + $0x5c] sm:$0xf]
    %v239 = vld [vmem:[#allocation7 + $0x60] sm:$0xf]
    %v240 = vld [vmem:[#allocation7 + $0x64] sm:$0xf]
    %v241 = vld [vmem:[#allocation7 + $0x68] sm:$0xf]
    %v242 = vld [vmem:[#allocation7 + $0x6c] sm:$0xf]
    %v243 = vld [vmem:[#allocation7 + $0x70] sm:$0xf]
    %v244 = vld [vmem:[#allocation7 + $0x74] sm:$0xf]
    %v245 = vld [vmem:[#allocation7 + $0x78] sm:$0xf]
    %v246 = vld [vmem:[#allocation7 + $0x7c] sm:$0xf]
    %v247 = vld [vmem:[%s4] sm:$0x1]
    %v249 = vlaneseq
    %v250 = vshrl.u32 %v249, 7
    %v251 = vsub.s32 0, %v250
    %v252 = vrot.slane %v247, %v251
    %v286 = vunpack.c.l.b16 %v215
    %v287 = vunpack.c.l.b16 %v216
    %v288 = vunpack.c.l.b16 %v217
    %v289 = vunpack.c.l.b16 %v218
    %v290 = vunpack.c.l.b16 %v219
    %v291 = vunpack.c.l.b16 %v220
    %v292 = vunpack.c.l.b16 %v221
    %v293 = vunpack.c.l.b16 %v222
    %v294 = vunpack.c.l.b16 %v223
    %v295 = vunpack.c.l.b16 %v224
    %v296 = vunpack.c.l.b16 %v225
    %v297 = vunpack.c.l.b16 %v226
    %v298 = vunpack.c.l.b16 %v227
    %v299 = vunpack.c.l.b16 %v228
    %v300 = vunpack.c.l.b16 %v229
    %v301 = vunpack.c.l.b16 %v230
    %v302 = vunpack.c.l.b16 %v231
    %v303 = vunpack.c.l.b16 %v232
    %v304 = vunpack.c.l.b16 %v233
    %v305 = vunpack.c.l.b16 %v234
    %v306 = vunpack.c.l.b16 %v235
    %v307 = vunpack.c.l.b16 %v236
    %v308 = vunpack.c.l.b16 %v237
    %v309 = vunpack.c.l.b16 %v238
    %v310 = vunpack.c.l.b16 %v239
    %v311 = vunpack.c.l.b16 %v240
    %v312 = vunpack.c.l.b16 %v241
    %v313 = vunpack.c.l.b16 %v242
    %v314 = vunpack.c.l.b16 %v243
    %v315 = vunpack.c.l.b16 %v244
    %v316 = vunpack.c.l.b16 %v245
    %v317 = vunpack.c.l.b16 %v246
    %v318 = vpack.c.b16 %v287, %v286
    %v319 = vpack.c.b16 %v289, %v288
    %v320 = vpack.c.b16 %v291, %v290
    %v321 = vpack.c.b16 %v293, %v292
    %v322 = vpack.c.b16 %v295, %v294
    %v323 = vpack.c.b16 %v297, %v296
    %v324 = vpack.c.b16 %v299, %v298
    %v325 = vpack.c.b16 %v301, %v300
    %v326 = vpack.c.b16 %v303, %v302
    %v327 = vpack.c.b16 %v305, %v304
    %v328 = vpack.c.b16 %v307, %v306
    %v329 = vpack.c.b16 %v309, %v308
    %v330 = vpack.c.b16 %v311, %v310
    %v331 = vpack.c.b16 %v313, %v312
    %v332 = vpack.c.b16 %v315, %v314
    %v333 = vpack.c.b16 %v317, %v316
    %350 = vmatprep.subr.bf16.mxu0 0
    %351 = vmatpush1.bf16.msra.mxu0 %v318
    %352 = vmatprep.subr.bf16.mxu0 0
    %353 = vmatpush1.bf16.msra.mxu0 %v319
    %354 = vmatprep.subr.bf16.mxu0 0
    %355 = vmatpush1.bf16.msra.mxu0 %v320
    %356 = vmatprep.subr.bf16.mxu0 0
    %357 = vmatpush1.bf16.msra.mxu0 %v321
    %358 = vmatprep.subr.bf16.mxu0 0
    %359 = vmatpush1.bf16.msra.mxu0 %v322
    %360 = vmatprep.subr.bf16.mxu0 0
    %361 = vmatpush1.bf16.msra.mxu0 %v323
    %362 = vmatprep.subr.bf16.mxu0 0
    %363 = vmatpush1.bf16.msra.mxu0 %v324
    %364 = vmatprep.subr.bf16.mxu0 0
    %365 = vmatpush1.bf16.msra.mxu0 %v325
    %366 = vmatprep.subr.bf16.mxu0 0
    %367 = vmatpush1.bf16.msra.mxu0 %v326
    %368 = vmatprep.subr.bf16.mxu0 0
    %369 = vmatpush1.bf16.msra.mxu0 %v327
    %370 = vmatprep.subr.bf16.mxu0 0
    %371 = vmatpush1.bf16.msra.mxu0 %v328
    %372 = vmatprep.subr.bf16.mxu0 0
    %373 = vmatpush1.bf16.msra.mxu0 %v329
    %374 = vmatprep.subr.bf16.mxu0 0
    %375 = vmatpush1.bf16.msra.mxu0 %v330
    %376 = vmatprep.subr.bf16.mxu0 0
    %377 = vmatpush1.bf16.msra.mxu0 %v331
    %378 = vmatprep.subr.bf16.mxu0 0
    %379 = vmatpush1.bf16.msra.mxu0 %v332
    %380 = vmatprep.subr.bf16.mxu0 0
    %381 = vmatpush1.bf16.msra.mxu0 %v333
    %382 = vmatprep.mubr.bf16.mxu0 %v214
    %383 = vmatmul.mubr.bf16.gmra.mrb[0].mxu0 %v213
    %v384 = vpop.f32.mrb[0].mxu0
    %v385 = vadd.f32 %v252, %v384
    %v386 = vpop.f32.mrb[0].mxu0
    %v387 = vpop.f32.mrb[0].mxu0
    %v388 = vpop.f32.mrb[0].mxu0
    %389 = vdwg.mxu0
    %v390 = vpack.c.bf16 %v385, %v385
    %391 = vst [vmem:[#allocation8] sm:$0x3] %v390
    // Predicated region
    $region34: #{tpu_custom_call.1} parent=1 // pred_check
      _
    $region35: #{tpu_custom_call.1} parent=1 // pred_check_branch
      %393 = sbr.rel (0) target = $region37
    $region36: #{tpu_custom_call.1} parent=1 // pred_region
      %s395 = ssub.s32 32, 32
      %396 = vsyncadd [#allocation4], %s395
      %s398 = sshll.u32 [#allocation8], 4
      %s399 = int_to_ptr.vmem [resolvable:$true] %s398
      %401 = dma.vmem_to_hbm [thread:$0]  %s399, 32, %s5, [#allocation4]
    $region37: #{tpu_custom_call.1} parent=1 // pred_fallthru
      _
    // Predicated region
    $region38: #{tpu_custom_call.1} parent=1 // pred_check
      _
    $region39: #{tpu_custom_call.1} parent=1 // pred_check_branch
      %403 = sbr.rel (0) target = $region41
    $region40: #{tpu_custom_call.1} parent=1 // pred_region
      %404 = dma.done [#allocation4], 32
    $region41: #{tpu_custom_call.1} parent=1 // pred_fallthru
      _
    %405 = vsyncpa [#allocation3], 1
    %406 = vsyncpa [#allocation6], 1
    %407 = vsyncpa [#allocation4], 1

</llo_original>
